<compile_context>
chip_gen: v7x
topology: tpu7x:2x2x1
jax: 0.10.0
libtpu: 0.0.40
codegen_flags: <defaults>
</compile_context>

<pallas_src>
import functools
import math

import jax
import jax.numpy as jnp
from jax.experimental import pallas as pl
from jax.experimental.pallas import tpu as pltpu


def _pair_indices(num_feature_field):
    row, col = [], []
    for i in range(num_feature_field - 1):
        for j in range(i + 1, num_feature_field):
            row.append(i)
            col.append(j)
    return row, col


def _round_up(x, m):
    return (x + m - 1) // m * m


# ----------------------------------------------------------------------------
# Pallas kernel
# ----------------------------------------------------------------------------
def _opnn_kernel(x_ref, w_ref, s_ref, o_ref, *, mxu_dtype):
    # x_ref: [Bt, F*E]        batch tile of flattened feat_emb (f32)
    # w_ref: [F*E, 2*PE_pad]  packed [K_packed | q-gather] weights (grid-invariant)
    # s_ref: [PE_pad, P]      0/1 segment-sum selector (grid-invariant)
    # o_ref: [Bt, P]
    pe_pad = s_ref.shape[0]

    # One wide MXU matmul (bf16 operands, f32 accumulation): computes both
    # t[b, pr*E+e2] = sum_e1 p*kernel AND the gathered q_packed in a single pass.
    x = x_ref[...].astype(mxu_dtype)
    w = w_ref[...].astype(mxu_dtype)
    tw = jnp.dot(x, w, preferred_element_type=jnp.float32)

    t = tw[:, :pe_pad]          # lane-aligned slice (pe_pad % 128 == 0)
    q = tw[:, pe_pad:]
    prod = t * q                # VPU elementwise, kept in f32 (v5e VPU has no bf16)

    # Per-pair reduce over the E-wide segments via a tiny selector matmul.
    o_ref[...] = jnp.dot(prod.astype(mxu_dtype), s_ref[...].astype(mxu_dtype),
                         preferred_element_type=jnp.float32).astype(o_ref.dtype)


# ----------------------------------------------------------------------------
# Wrapper
# ----------------------------------------------------------------------------
def outer_product_layer(feat_emb, w_packed, seg_sel, *, block_b=2048,
                        mxu_dtype=jnp.bfloat16):
    """feat_emb: [B, F, E] f32; w_packed: [F*E, 2*PE_pad]; seg_sel: [PE_pad, P]."""
    B, F, E = feat_emb.shape
    FE = F * E
    PE_pad, P = seg_sel.shape
    assert w_packed.shape == (FE, 2 * PE_pad)

    # Free metadata reshape (row-major contiguous) -> no extra HBM traffic.
    x2d = feat_emb.reshape(B, FE)

    # Batch tile: biggest tile <= block_b, rows a multiple of 8 sublanes.
    # No wrapper jnp.pad: grid = cdiv(B, bt); Pallas masks the ragged last tile
    # (rows are independent, so garbage OOB input rows never touch valid output).
    bt = min(block_b, _round_up(B, 8))
    # Ensure >=2 grid steps when possible so the "parallel" batch axis spans
    # both TensorCores on v7x and the input/output double-buffer has overlap.
    if pl.cdiv(B, bt) < 2:
        bt = max(8, _round_up(pl.cdiv(B, 2), 8))
    grid_b = pl.cdiv(B, bt)

    kernel = functools.partial(_opnn_kernel, mxu_dtype=mxu_dtype)
    return pl.pallas_call(
        kernel,
        out_shape=jax.ShapeDtypeStruct((B, P), jnp.float32),
        grid_spec=pl.GridSpec(
            grid=(grid_b,),
            in_specs=[
                pl.BlockSpec((bt, FE), lambda b: (b, 0)),          # batch-tiled
                pl.BlockSpec((FE, 2 * PE_pad), lambda b: (0, 0)),  # resident weights
                pl.BlockSpec((PE_pad, P), lambda b: (0, 0)),       # resident selector
            ],
            out_specs=pl.BlockSpec((bt, P), lambda b: (b, 0)),
        ),
        compiler_params=pltpu.CompilerParams(
            dimension_semantics=("parallel",)),      # shard batch across TCs (v7x)
    )(x2d, w_packed, seg_sel)


# ----------------------------------------------------------------------------
# Parameter init / one-time packing (done once, NOT per forward call)
# ----------------------------------------------------------------------------
def init_kernel_param(key, num_feature_field, embedding_size):
    """Deterministic xavier_uniform_ equivalent for shape [E, P, E]."""
    E = embedding_size
    P = num_feature_field * (num_feature_field - 1) // 2
    # PyTorch fan computation for a 3D tensor (E, P, E):
    #   receptive = E, fan_in = P*E, fan_out = E*E
    fan_in, fan_out = P * E, E * E
    bound = math.sqrt(6.0 / (fan_in + fan_out))
    return jax.random.uniform(key, (E, P, E), jnp.float32, -bound, bound)


def pack_kernel_param(kernel, num_feature_field):
    """Pack [E, P, E] kernel into the fused weight/selector matrices (one-time)."""
    E, P, _ = kernel.shape
    F = num_feature_field
    row, col = _pair_indices(F)
    assert len(row) == P
    FE = F * E
    PE_pad = _round_up(P * E, 128)   # lane-align the t / q halves

    k_packed = jnp.zeros((FE, PE_pad), jnp.float32)
    gather_q = jnp.zeros((FE, PE_pad), jnp.float32)
    eye_e = jnp.eye(E, dtype=jnp.float32)
    for pr in range(P):
        # kernel[:, pr, :] is [e2, e1]; block wants [e1, e2].
        k_packed = k_packed.at[row[pr] * E:(row[pr] + 1) * E,
                               pr * E:(pr + 1) * E].set(kernel[:, pr, :].T)
        gather_q = gather_q.at[col[pr] * E:(col[pr] + 1) * E,
                               pr * E:(pr + 1) * E].set(eye_e)
    w_packed = jnp.concatenate([k_packed, gather_q], axis=1)     # [FE, 2*PE_pad]

    seg_sel = jnp.zeros((PE_pad, P), jnp.float32)                # [PE_pad, P]
    for pr in range(P):
        seg_sel = seg_sel.at[pr * E:(pr + 1) * E, pr].set(1.0)
    return w_packed, seg_sel


# ----------------------------------------------------------------------------
if __name__ == "__main__":
    F = 5                     # num_feature_field
    E = 32                    # embedding_size
    P = F * (F - 1) // 2      # num_pairs = 10

    key = jax.random.PRNGKey(0)
    k_feat1, k_feat2, k_feat3, k_param = jax.random.split(key, 4)
    kernel = init_kernel_param(k_param, F, E)

    # One-time parameter packing (parameter storage time, not per step).
    w_packed, seg_sel = pack_kernel_param(kernel, F)

    def ref_forward(x, kern, mxu_dtype=None):
        """Pure-JAX reference of the exact PyTorch forward.
        If mxu_dtype is given, emulate the in-kernel bf16 MXU operand casts."""
        row, col = _pair_indices(F)
        p = x[:, jnp.asarray(row)]                               # [B, P, E]
        q = x[:, jnp.asarray(col)]                               # [B, P, E]
        if mxu_dtype is not None:
            p = p.astype(mxu_dtype).astype(jnp.float32)
            kern = kern.astype(mxu_dtype).astype(jnp.float32)
            q = q.astype(mxu_dtype).astype(jnp.float32)
        t = jnp.einsum('bpi,opi->bpo', p, kern)                  # [B, P, E] over e1
        prod = t * q
        if mxu_dtype is not None:
            prod = prod.astype(mxu_dtype).astype(jnp.float32)
        return jnp.sum(prod, axis=-1)                            # [B, P]

    ok = True

    # 1) f32 MXU path, single grid step: exact PyTorch semantics, tight tol.
    B = 8
    feat = jax.random.normal(k_feat1, (B, F, E), jnp.float32)
    out = jax.block_until_ready(
        outer_product_layer(feat, w_packed, seg_sel, mxu_dtype=jnp.float32))
    assert out.shape == (B, P)
    ok &= bool(jnp.allclose(out, ref_forward(feat, kernel), atol=1e-3, rtol=1e-3))

    # 2) bf16 MXU path (default), multi-step grid with ragged last tile
    #    (B=40, bt=16 -> 3 grid steps, last tile masked).
    B = 40
    feat = jax.random.normal(k_feat2, (B, F, E), jnp.float32)
    out = jax.block_until_ready(
        outer_product_layer(feat, w_packed, seg_sel, block_b=16))
    assert out.shape == (B, P)
    ok &= bool(jnp.allclose(out, ref_forward(feat, kernel, jnp.bfloat16),
                            atol=1e-3, rtol=1e-3))     # algorithmic (bf16-emulated)
    ok &= bool(jnp.allclose(out, ref_forward(feat, kernel),
                            atol=5e-2, rtol=5e-2))     # semantic vs f32 reference

    # 3) non-multiple-of-8 batch: masked tail rows (B=13, bt=8, 2 grid steps).
    B = 13
    feat = jax.random.normal(k_feat3, (B, F, E), jnp.float32)
    out = jax.block_until_ready(
        outer_product_layer(feat, w_packed, seg_sel, block_b=8,
                            mxu_dtype=jnp.float32))
    assert out.shape == (B, P)
    ok &= bool(jnp.allclose(out, ref_forward(feat, kernel), atol=1e-3, rtol=1e-3))

    if not ok:
        raise SystemExit("mismatch vs reference")
    print("KERNEL_OK")
</pallas_src>

<mosaic_0001>
module attributes {stable_mosaic.version = 11 : i64} {
  func.func @_opnn_kernel(%arg0: i32, %arg1: memref<8x160xf32, #tpu.memory_space<vmem>>, %arg2: memref<160x768xf32, #tpu.memory_space<vmem>>, %arg3: memref<384x10xf32, #tpu.memory_space<vmem>>, %arg4: memref<8x10xf32, #tpu.memory_space<vmem>>) attributes {dimension_semantics = [#tpu.dimension_semantics<parallel>], iteration_bounds = array<i64: 1>, scalar_prefetch = 0 : i64, scratch_operands = 0 : i64, tpu.core_type = #tpu.core_type<tc>, window_params = [{transform_indices = @transform_0, window_bounds = array<i64: 8, 160>}, {pipeline_mode = #tpu.pipeline_mode<synchronous>, transform_indices = @transform_1, window_bounds = array<i64: 160, 768>}, {pipeline_mode = #tpu.pipeline_mode<synchronous>, transform_indices = @transform_2, window_bounds = array<i64: 384, 10>}, {transform_indices = @transform_3, window_bounds = array<i64: 8, 10>}]} {
    %c0 = arith.constant 0 : index
    %c0_0 = arith.constant 0 : index
    %0 = vector.load %arg1[%c0, %c0_0] : memref<8x160xf32, #tpu.memory_space<vmem>>, vector<8x160xf32>
    %c0_1 = arith.constant 0 : index
    %c0_2 = arith.constant 0 : index
    %1 = vector.load %arg2[%c0_1, %c0_2] : memref<160x768xf32, #tpu.memory_space<vmem>>, vector<160x768xf32>
    %cst = arith.constant dense<0.000000e+00> : vector<8x768xf32>
    %2 = tpu.matmul %0, %1, %cst {dimension_numbers = #tpu.dot_dimension_numbers<[1], [0], [0], [1], [0, 0, 1, 1], [], []>} : vector<8x160xf32>, vector<160x768xf32>, vector<8x768xf32> -> vector<8x768xf32>
    %3 = vector.extract_strided_slice %2 {offsets = [0, 0], sizes = [8, 384], strides = [1, 1]} : vector<8x768xf32> to vector<8x384xf32>
    %4 = vector.extract_strided_slice %2 {offsets = [0, 384], sizes = [8, 384], strides = [1, 1]} : vector<8x768xf32> to vector<8x384xf32>
    %5 = arith.mulf %3, %4 : vector<8x384xf32>
    %c0_3 = arith.constant 0 : index
    %c0_4 = arith.constant 0 : index
    %6 = vector.load %arg3[%c0_3, %c0_4] : memref<384x10xf32, #tpu.memory_space<vmem>>, vector<384x10xf32>
    %cst_5 = arith.constant dense<0.000000e+00> : vector<8x10xf32>
    %7 = tpu.matmul %5, %6, %cst_5 {dimension_numbers = #tpu.dot_dimension_numbers<[1], [0], [0], [1], [0, 0, 1, 1], [], []>} : vector<8x384xf32>, vector<384x10xf32>, vector<8x10xf32> -> vector<8x10xf32>
    %c0_6 = arith.constant 0 : index
    %c0_7 = arith.constant 0 : index
    %8 = vector.load %arg4[%c0_6, %c0_7] : memref<8x10xf32, #tpu.memory_space<vmem>>, vector<8x10xf32>
    tpu.vector_store %arg4[%c0_6, %c0_7], %7 {strides = array<i32>} : memref<8x10xf32, #tpu.memory_space<vmem>>, vector<8x10xf32>,
    return
  }
  func.func @transform_0(%arg0: i32) -> (i32, i32) {
    %c0_i32 = arith.constant 0 : i32
    %c0_i32_0 = arith.constant 0 : i32
    return %arg0, %c0_i32 : i32, i32
  }
  func.func @transform_1(%arg0: i32) -> (i32, i32) {
    %c0_i32 = arith.constant 0 : i32
    %c0_i32_0 = arith.constant 0 : i32
    %c0_i32_1 = arith.constant 0 : i32
    return %c0_i32, %c0_i32_0 : i32, i32
  }
  func.func @transform_2(%arg0: i32) -> (i32, i32) {
    %c0_i32 = arith.constant 0 : i32
    %c0_i32_0 = arith.constant 0 : i32
    %c0_i32_1 = arith.constant 0 : i32
    return %c0_i32, %c0_i32_0 : i32, i32
  }
  func.func @transform_3(%arg0: i32) -> (i32, i32) {
    %c0_i32 = arith.constant 0 : i32
    %c0_i32_0 = arith.constant 0 : i32
    return %arg0, %c0_i32 : i32, i32
  }
}

</mosaic_0001>

<llo_original>
// kernel: tpu_custom_call.1
$region0: #{tpu_custom_call.1}
  #allocation0 [shape = 'u32[]', space=smem, size = 0x4, offset = 0x4, fixed_abs, tag = 'smem constant byte address 0x4 - core index']
  #allocation1 [shape = 'u32[144,128]{1,0:T(1,128)}', space=vmem, size = 0x12000, scoped, tag = 'internal scratch']
  %s0 = inlined_call_operand.vmem [shape: f32[8,160], index: 0, kind: input, shape index: {}]
  %s1 = inlined_call_operand.hbm [shape: f32[160,768], index: 1, kind: input, shape index: {}]
  %s2 = inlined_call_operand.vmem [shape: f32[384,10], index: 2, kind: input, shape index: {}]
  %s3 = inlined_call_operand.hbm [shape: f32[8,10], index: 3, kind: output, shape index: {}]
  %s4 = sld [smem:[#allocation0]]
  $region26: #{tpu_custom_call.1} parent=0
    _
  %s6 = ssub.s32 1, %s4
  %s7 = scalar_select 0, %s6, %s4
  $region1: #{tpu_custom_call.1} parent=0
    #allocation2 [shape = 'u8[491520]{0}', space=vmem, size = 0x78000, scoped, tag = 'input window, operand 1, single buffered']
    #allocation3 [shape = 's32[1]{0}', space=sflag, size = 0x4, scoped, tag = 'scoped memory for tpu_custom_call.1']
    #allocation4 [shape = 's32[1]{0}', space=sflag, size = 0x4, scoped, tag = 'scoped memory for tpu_custom_call.1']
    #allocation5 [shape = 'u8[4096]{0}', space=vmem, size = 0x1000, scoped, tag = 'output window, operand 0, single buffered']
    %8 = vsyncpa [#allocation3], 0
    %9 = vsyncpa [#allocation4], 0
    // Predicated region
    $region2: #{tpu_custom_call.1} parent=1 // pred_check
      _
    $region3: #{tpu_custom_call.1} parent=1 // pred_check_branch
      %11 = sbr.rel (0) target = $region5
    $region4: #{tpu_custom_call.1} parent=1 // pred_region
      _
    $region5: #{tpu_custom_call.1} parent=1 // pred_fallthru
      _
    // Predicated region
    $region6: #{tpu_custom_call.1} parent=1 // pred_check
      _
    $region7: #{tpu_custom_call.1} parent=1 // pred_check_branch
      %13 = sbr.rel (0) target = $region9
    $region8: #{tpu_custom_call.1} parent=1 // pred_region
      %s15 = ssub.s32 15360, 15360
      %16 = vsyncadd [#allocation3], %s15
      %s17 = sshll.u32 [#allocation2], 4
      %s18 = int_to_ptr.vmem [resolvable:$true] %s17
      %23 = dma.hbm_to_vmem [thread:$0]  %s1, 15360, %s18, [#allocation3], 768, 768, 48
    $region9: #{tpu_custom_call.1} parent=1 // pred_fallthru
      _
    // Predicated region
    $region10: #{tpu_custom_call.1} parent=1 // pred_check
      _
    $region11: #{tpu_custom_call.1} parent=1 // pred_check_branch
      %25 = sbr.rel (0) target = $region13
    $region12: #{tpu_custom_call.1} parent=1 // pred_region
      _
    $region13: #{tpu_custom_call.1} parent=1 // pred_fallthru
      _
    // Predicated region
    $region14: #{tpu_custom_call.1} parent=1 // pred_check
      _
    $region15: #{tpu_custom_call.1} parent=1 // pred_check_branch
      %27 = sbr.rel (0) target = $region17
    $region16: #{tpu_custom_call.1} parent=1 // pred_region
      %28 = dma.done [#allocation3], 15360
    $region17: #{tpu_custom_call.1} parent=1 // pred_fallthru
      _
    %v29 = vld [vmem:[%s0] sm:$0xff]
    %v30 = vld [vmem:[%s0 + $0x8] sm:$0xff]
    %v31 = vld [vmem:[#allocation2] sm:$0xff]
    %v32 = vld [vmem:[#allocation2 + $0x8] sm:$0xff]
    %v33 = vld [vmem:[#allocation2 + $0x10] sm:$0xff]
    %v34 = vld [vmem:[#allocation2 + $0x18] sm:$0xff]
    %v35 = vld [vmem:[#allocation2 + $0x20] sm:$0xff]
    %v36 = vld [vmem:[#allocation2 + $0x28] sm:$0xff]
    %v37 = vld [vmem:[#allocation2 + $0x30] sm:$0xff]
    %v38 = vld [vmem:[#allocation2 + $0x38] sm:$0xff]
    %v39 = vld [vmem:[#allocation2 + $0x40] sm:$0xff]
    %v40 = vld [vmem:[#allocation2 + $0x48] sm:$0xff]
    %v41 = vld [vmem:[#allocation2 + $0x50] sm:$0xff]
    %v42 = vld [vmem:[#allocation2 + $0x58] sm:$0xff]
    %v43 = vld [vmem:[#allocation2 + $0x60] sm:$0xff]
    %v44 = vld [vmem:[#allocation2 + $0x68] sm:$0xff]
    %v45 = vld [vmem:[#allocation2 + $0x70] sm:$0xff]
    %v46 = vld [vmem:[#allocation2 + $0x78] sm:$0xff]
    %v47 = vld [vmem:[#allocation2 + $0x80] sm:$0xff]
    %v48 = vld [vmem:[#allocation2 + $0x88] sm:$0xff]
    %v49 = vld [vmem:[#allocation2 + $0x90] sm:$0xff]
    %v50 = vld [vmem:[#allocation2 + $0x98] sm:$0xff]
    %v51 = vld [vmem:[#allocation2 + $0xa0] sm:$0xff]
    %v52 = vld [vmem:[#allocation2 + $0xa8] sm:$0xff]
    %v53 = vld [vmem:[#allocation2 + $0xb0] sm:$0xff]
    %v54 = vld [vmem:[#allocation2 + $0xb8] sm:$0xff]
    %v55 = vld [vmem:[#allocation2 + $0xc0] sm:$0xff]
    %v56 = vld [vmem:[#allocation2 + $0xc8] sm:$0xff]
    %v57 = vld [vmem:[#allocation2 + $0xd0] sm:$0xff]
    %v58 = vld [vmem:[#allocation2 + $0xd8] sm:$0xff]
    %v59 = vld [vmem:[#allocation2 + $0xe0] sm:$0xff]
    %v60 = vld [vmem:[#allocation2 + $0xe8] sm:$0xff]
    %v61 = vld [vmem:[#allocation2 + $0xf0] sm:$0xff]
    %v62 = vld [vmem:[#allocation2 + $0xf8] sm:$0xff]
    %v63 = vld [vmem:[#allocation2 + $0x100] sm:$0xff]
    %v64 = vld [vmem:[#allocation2 + $0x108] sm:$0xff]
    %v65 = vld [vmem:[#allocation2 + $0x110] sm:$0xff]
    %v66 = vld [vmem:[#allocation2 + $0x118] sm:$0xff]
    %v67 = vld [vmem:[#allocation2 + $0x120] sm:$0xff]
    %v68 = vld [vmem:[#allocation2 + $0x128] sm:$0xff]
    %v69 = vld [vmem:[#allocation2 + $0x130] sm:$0xff]
    %v70 = vld [vmem:[#allocation2 + $0x138] sm:$0xff]
    %v71 = vld [vmem:[#allocation2 + $0x140] sm:$0xff]
    %v72 = vld [vmem:[#allocation2 + $0x148] sm:$0xff]
    %v73 = vld [vmem:[#allocation2 + $0x150] sm:$0xff]
    %v74 = vld [vmem:[#allocation2 + $0x158] sm:$0xff]
    %v75 = vld [vmem:[#allocation2 + $0x160] sm:$0xff]
    %v76 = vld [vmem:[#allocation2 + $0x168] sm:$0xff]
    %v77 = vld [vmem:[#allocation2 + $0x170] sm:$0xff]
    %v78 = vld [vmem:[#allocation2 + $0x178] sm:$0xff]
    %v79 = vld [vmem:[#allocation2 + $0x180] sm:$0xff]
    %v80 = vld [vmem:[#allocation2 + $0x188] sm:$0xff]
    %v81 = vld [vmem:[#allocation2 + $0x190] sm:$0xff]
    %v82 = vld [vmem:[#allocation2 + $0x198] sm:$0xff]
    %v83 = vld [vmem:[#allocation2 + $0x1a0] sm:$0xff]
    %v84 = vld [vmem:[#allocation2 + $0x1a8] sm:$0xff]
    %v85 = vld [vmem:[#allocation2 + $0x1b0] sm:$0xff]
    %v86 = vld [vmem:[#allocation2 + $0x1b8] sm:$0xff]
    %v87 = vld [vmem:[#allocation2 + $0x1c0] sm:$0xff]
    %v88 = vld [vmem:[#allocation2 + $0x1c8] sm:$0xff]
    %v89 = vld [vmem:[#allocation2 + $0x1d0] sm:$0xff]
    %v90 = vld [vmem:[#allocation2 + $0x1d8] sm:$0xff]
    %v91 = vld [vmem:[#allocation2 + $0x1e0] sm:$0xff]
    %v92 = vld [vmem:[#allocation2 + $0x1e8] sm:$0xff]
    %v93 = vld [vmem:[#allocation2 + $0x1f0] sm:$0xff]
    %v94 = vld [vmem:[#allocation2 + $0x1f8] sm:$0xff]
    %v95 = vld [vmem:[#allocation2 + $0x200] sm:$0xff]
    %v96 = vld [vmem:[#allocation2 + $0x208] sm:$0xff]
    %v97 = vld [vmem:[#allocation2 + $0x210] sm:$0xff]
    %v98 = vld [vmem:[#allocation2 + $0x218] sm:$0xff]
    %v99 = vld [vmem:[#allocation2 + $0x220] sm:$0xff]
    %v100 = vld [vmem:[#allocation2 + $0x228] sm:$0xff]
    %v101 = vld [vmem:[#allocation2 + $0x230] sm:$0xff]
    %v102 = vld [vmem:[#allocation2 + $0x238] sm:$0xff]
    %v103 = vld [vmem:[#allocation2 + $0x240] sm:$0xff]
    %v104 = vld [vmem:[#allocation2 + $0x248] sm:$0xff]
    %v105 = vld [vmem:[#allocation2 + $0x250] sm:$0xff]
    %v106 = vld [vmem:[#allocation2 + $0x258] sm:$0xff]
    %v107 = vld [vmem:[#allocation2 + $0x260] sm:$0xff]
    %v108 = vld [vmem:[#allocation2 + $0x268] sm:$0xff]
    %v109 = vld [vmem:[#allocation2 + $0x270] sm:$0xff]
    %v110 = vld [vmem:[#allocation2 + $0x278] sm:$0xff]
    %v111 = vld [vmem:[#allocation2 + $0x280] sm:$0xff]
    %v112 = vld [vmem:[#allocation2 + $0x288] sm:$0xff]
    %v113 = vld [vmem:[#allocation2 + $0x290] sm:$0xff]
    %v114 = vld [vmem:[#allocation2 + $0x298] sm:$0xff]
    %v115 = vld [vmem:[#allocation2 + $0x2a0] sm:$0xff]
    %v116 = vld [vmem:[#allocation2 + $0x2a8] sm:$0xff]
    %v117 = vld [vmem:[#allocation2 + $0x2b0] sm:$0xff]
    %v118 = vld [vmem:[#allocation2 + $0x2b8] sm:$0xff]
    %v119 = vld [vmem:[#allocation2 + $0x2c0] sm:$0xff]
    %v120 = vld [vmem:[#allocation2 + $0x2c8] sm:$0xff]
    %v121 = vld [vmem:[#allocation2 + $0x2d0] sm:$0xff]
    %v122 = vld [vmem:[#allocation2 + $0x2d8] sm:$0xff]
    %v123 = vld [vmem:[#allocation2 + $0x2e0] sm:$0xff]
    %v124 = vld [vmem:[#allocation2 + $0x2e8] sm:$0xff]
    %v125 = vld [vmem:[#allocation2 + $0x2f0] sm:$0xff]
    %v126 = vld [vmem:[#allocation2 + $0x2f8] sm:$0xff]
    %v127 = vld [vmem:[#allocation2 + $0x300] sm:$0xff]
    %v128 = vld [vmem:[#allocation2 + $0x308] sm:$0xff]
    %v129 = vld [vmem:[#allocation2 + $0x310] sm:$0xff]
    %v130 = vld [vmem:[#allocation2 + $0x318] sm:$0xff]
    %v131 = vld [vmem:[#allocation2 + $0x320] sm:$0xff]
    %v132 = vld [vmem:[#allocation2 + $0x328] sm:$0xff]
    %v133 = vld [vmem:[#allocation2 + $0x330] sm:$0xff]
    %v134 = vld [vmem:[#allocation2 + $0x338] sm:$0xff]
    %v135 = vld [vmem:[#allocation2 + $0x340] sm:$0xff]
    %v136 = vld [vmem:[#allocation2 + $0x348] sm:$0xff]
    %v137 = vld [vmem:[#allocation2 + $0x350] sm:$0xff]
    %v138 = vld [vmem:[#allocation2 + $0x358] sm:$0xff]
    %v139 = vld [vmem:[#allocation2 + $0x360] sm:$0xff]
    %v140 = vld [vmem:[#allocation2 + $0x368] sm:$0xff]
    %v141 = vld [vmem:[#allocation2 + $0x370] sm:$0xff]
    %v142 = vld [vmem:[#allocation2 + $0x378] sm:$0xff]
    %v143 = vld [vmem:[#allocation2 + $0x380] sm:$0xff]
    %v144 = vld [vmem:[#allocation2 + $0x388] sm:$0xff]
    %v145 = vld [vmem:[#allocation2 + $0x390] sm:$0xff]
    %v146 = vld [vmem:[#allocation2 + $0x398] sm:$0xff]
    %v147 = vld [vmem:[#allocation2 + $0x3a0] sm:$0xff]
    %v148 = vld [vmem:[#allocation2 + $0x3a8] sm:$0xff]
    %v149 = vld [vmem:[#allocation2 + $0x3b0] sm:$0xff]
    %v150 = vld [vmem:[#allocation2 + $0x3b8] sm:$0xff]
    %vm151 = vcmask 261120
    %v153 = vsel %vm151, %v30, 0
    %155 = vmatprep.subr.mxu0 %v32
    %156 = vmatpush1.msra.mxu0 %v31
    %157 = vmatprep.subr.mxu0 %v38
    %158 = vmatpush1.msra.mxu0 %v37
    %159 = vmatprep.subr.mxu0 %v44
    %160 = vmatpush1.msra.mxu0 %v43
    %161 = vmatprep.subr.mxu0 %v50
    %162 = vmatpush1.msra.mxu0 %v49
    %163 = vmatprep.subr.mxu0 %v56
    %164 = vmatpush1.msra.mxu0 %v55
    %165 = vmatprep.subr.mxu0 %v62
    %166 = vmatpush1.msra.mxu0 %v61
    %167 = vmatprep.subr.mxu0 %v68
    %168 = vmatpush1.msra.mxu0 %v67
    %169 = vmatprep.subr.mxu0 %v74
    %170 = vmatpush1.msra.mxu0 %v73
    %171 = vmatprep.subr.mxu0 %v80
    %172 = vmatpush1.msra.mxu0 %v79
    %173 = vmatprep.subr.mxu0 %v86
    %174 = vmatpush1.msra.mxu0 %v85
    %175 = vmatprep.subr.mxu0 %v92
    %176 = vmatpush1.msra.mxu0 %v91
    %177 = vmatprep.subr.mxu0 %v98
    %178 = vmatpush1.msra.mxu0 %v97
    %179 = vmatprep.subr.mxu0 %v104
    %180 = vmatpush1.msra.mxu0 %v103
    %181 = vmatprep.subr.mxu0 %v110
    %182 = vmatpush1.msra.mxu0 %v109
    %183 = vmatprep.subr.mxu0 %v116
    %184 = vmatpush1.msra.mxu0 %v115
    %185 = vmatprep.subr.mxu0 %v122
    %186 = vmatpush1.msra.mxu0 %v121
    %187 = vmatprep.subr.mxu0 %v128
    %188 = vmatpush1.msra.mxu0 %v127
    %189 = vmatprep.subr.mxu0 %v134
    %190 = vmatpush1.msra.mxu0 %v133
    %191 = vmatprep.subr.mxu0 %v140
    %192 = vmatpush1.msra.mxu0 %v139
    %193 = vmatprep.subr.mxu0 %v146
    %194 = vmatpush1.msra.mxu0 %v145
    %195 = vmatprep.subr.mxu0 0.0
    %196 = vmatpush1.msra.mxu0 0.0
    %197 = vmatprep.subr.mxu0 0.0
    %198 = vmatpush1.msra.mxu0 0.0
    %199 = vmatprep.subr.mxu0 0.0
    %200 = vmatpush1.msra.mxu0 0.0
    %201 = vmatprep.subr.mxu0 0.0
    %202 = vmatpush1.msra.mxu0 0.0
    %203 = vmatprep.subr.mxu0 0.0
    %204 = vmatpush1.msra.mxu0 0.0
    %205 = vmatprep.subr.mxu0 0.0
    %206 = vmatpush1.msra.mxu0 0.0
    %207 = vmatprep.subr.mxu0 0.0
    %208 = vmatpush1.msra.mxu0 0.0
    %209 = vmatprep.subr.mxu0 0.0
    %210 = vmatpush1.msra.mxu0 0.0
    %211 = vmatprep.subr.mxu0 0.0
    %212 = vmatpush1.msra.mxu0 0.0
    %213 = vmatprep.subr.mxu0 0.0
    %214 = vmatpush1.msra.mxu0 0.0
    %215 = vmatprep.subr.mxu0 0.0
    %216 = vmatpush1.msra.mxu0 0.0
    %217 = vmatprep.subr.mxu0 0.0
    %218 = vmatpush1.msra.mxu0 0.0
    %219 = vmatprep.mubr.f32.mxu0 %v153
    %220 = vmatmul.mubr.f32.gmra.mrb[0].mxu0 %v29
    %v221 = vpop.f32.mrb[0].mxu0
    %v222 = vadd.f32 0.0, %v221
    %v223 = vpop.f32.mrb[0].mxu0
    %v224 = vadd.f32 0.0, %v223
    %225 = vdwg.mxu0
    %226 = vmatprep.subr.mxu0 %v34
    %227 = vmatpush1.msra.mxu0 %v33
    %228 = vmatprep.subr.mxu0 %v40
    %229 = vmatpush1.msra.mxu0 %v39
    %230 = vmatprep.subr.mxu0 %v46
    %231 = vmatpush1.msra.mxu0 %v45
    %232 = vmatprep.subr.mxu0 %v52
    %233 = vmatpush1.msra.mxu0 %v51
    %234 = vmatprep.subr.mxu0 %v58
    %235 = vmatpush1.msra.mxu0 %v57
    %236 = vmatprep.subr.mxu0 %v64
    %237 = vmatpush1.msra.mxu0 %v63
    %238 = vmatprep.subr.mxu0 %v70
    %239 = vmatpush1.msra.mxu0 %v69
    %240 = vmatprep.subr.mxu0 %v76
    %241 = vmatpush1.msra.mxu0 %v75
    %242 = vmatprep.subr.mxu0 %v82
    %243 = vmatpush1.msra.mxu0 %v81
    %244 = vmatprep.subr.mxu0 %v88
    %245 = vmatpush1.msra.mxu0 %v87
    %246 = vmatprep.subr.mxu0 %v94
    %247 = vmatpush1.msra.mxu0 %v93
    %248 = vmatprep.subr.mxu0 %v100
    %249 = vmatpush1.msra.mxu0 %v99
    %250 = vmatprep.subr.mxu0 %v106
    %251 = vmatpush1.msra.mxu0 %v105
    %252 = vmatprep.subr.mxu0 %v112
    %253 = vmatpush1.msra.mxu0 %v111
    %254 = vmatprep.subr.mxu0 %v118
    %255 = vmatpush1.msra.mxu0 %v117
    %256 = vmatprep.subr.mxu0 %v124
    %257 = vmatpush1.msra.mxu0 %v123
    %258 = vmatprep.subr.mxu0 %v130
    %259 = vmatpush1.msra.mxu0 %v129
    %260 = vmatprep.subr.mxu0 %v136
    %261 = vmatpush1.msra.mxu0 %v135
    %262 = vmatprep.subr.mxu0 %v142
    %263 = vmatpush1.msra.mxu0 %v141
    %264 = vmatprep.subr.mxu0 %v148
    %265 = vmatpush1.msra.mxu0 %v147
    %266 = vmatprep.subr.mxu0 0.0
    %267 = vmatpush1.msra.mxu0 0.0
    %268 = vmatprep.subr.mxu0 0.0
    %269 = vmatpush1.msra.mxu0 0.0
    %270 = vmatprep.subr.mxu0 0.0
    %271 = vmatpush1.msra.mxu0 0.0
    %272 = vmatprep.subr.mxu0 0.0
    %273 = vmatpush1.msra.mxu0 0.0
    %274 = vmatprep.subr.mxu0 0.0
    %275 = vmatpush1.msra.mxu0 0.0
    %276 = vmatprep.subr.mxu0 0.0
    %277 = vmatpush1.msra.mxu0 0.0
    %278 = vmatprep.subr.mxu0 0.0
    %279 = vmatpush1.msra.mxu0 0.0
    %280 = vmatprep.subr.mxu0 0.0
    %281 = vmatpush1.msra.mxu0 0.0
    %282 = vmatprep.subr.mxu0 0.0
    %283 = vmatpush1.msra.mxu0 0.0
    %284 = vmatprep.subr.mxu0 0.0
    %285 = vmatpush1.msra.mxu0 0.0
    %286 = vmatprep.subr.mxu0 0.0
    %287 = vmatpush1.msra.mxu0 0.0
    %288 = vmatprep.subr.mxu0 0.0
    %289 = vmatpush1.msra.mxu0 0.0
    %290 = vmatprep.mubr.f32.mxu0 %v153
    %291 = vmatmul.mubr.f32.gmra.mrb[0].mxu0 %v29
    %v292 = vpop.f32.mrb[0].mxu0
    %v293 = vadd.f32 0.0, %v292
    %v294 = vpop.f32.mrb[0].mxu0
    %v295 = vadd.f32 0.0, %v294
    %296 = vdwg.mxu0
    %297 = vmatprep.subr.mxu0 %v36
    %298 = vmatpush1.msra.mxu0 %v35
    %299 = vmatprep.subr.mxu0 %v42
    %300 = vmatpush1.msra.mxu0 %v41
    %301 = vmatprep.subr.mxu0 %v48
    %302 = vmatpush1.msra.mxu0 %v47
    %303 = vmatprep.subr.mxu0 %v54
    %304 = vmatpush1.msra.mxu0 %v53
    %305 = vmatprep.subr.mxu0 %v60
    %306 = vmatpush1.msra.mxu0 %v59
    %307 = vmatprep.subr.mxu0 %v66
    %308 = vmatpush1.msra.mxu0 %v65
    %309 = vmatprep.subr.mxu0 %v72
    %310 = vmatpush1.msra.mxu0 %v71
    %311 = vmatprep.subr.mxu0 %v78
    %312 = vmatpush1.msra.mxu0 %v77
    %313 = vmatprep.subr.mxu0 %v84
    %314 = vmatpush1.msra.mxu0 %v83
    %315 = vmatprep.subr.mxu0 %v90
    %316 = vmatpush1.msra.mxu0 %v89
    %317 = vmatprep.subr.mxu0 %v96
    %318 = vmatpush1.msra.mxu0 %v95
    %319 = vmatprep.subr.mxu0 %v102
    %320 = vmatpush1.msra.mxu0 %v101
    %321 = vmatprep.subr.mxu0 %v108
    %322 = vmatpush1.msra.mxu0 %v107
    %323 = vmatprep.subr.mxu0 %v114
    %324 = vmatpush1.msra.mxu0 %v113
    %325 = vmatprep.subr.mxu0 %v120
    %326 = vmatpush1.msra.mxu0 %v119
    %327 = vmatprep.subr.mxu0 %v126
    %328 = vmatpush1.msra.mxu0 %v125
    %329 = vmatprep.subr.mxu0 %v132
    %330 = vmatpush1.msra.mxu0 %v131
    %331 = vmatprep.subr.mxu0 %v138
    %332 = vmatpush1.msra.mxu0 %v137
    %333 = vmatprep.subr.mxu0 %v144
    %334 = vmatpush1.msra.mxu0 %v143
    %335 = vmatprep.subr.mxu0 %v150
    %336 = vmatpush1.msra.mxu0 %v149
    %337 = vmatprep.subr.mxu0 0.0
    %338 = vmatpush1.msra.mxu0 0.0
    %339 = vmatprep.subr.mxu0 0.0
    %340 = vmatpush1.msra.mxu0 0.0
    %341 = vmatprep.subr.mxu0 0.0
    %342 = vmatpush1.msra.mxu0 0.0
    %343 = vmatprep.subr.mxu0 0.0
    %344 = vmatpush1.msra.mxu0 0.0
    %345 = vmatprep.subr.mxu0 0.0
    %346 = vmatpush1.msra.mxu0 0.0
    %347 = vmatprep.subr.mxu0 0.0
    %348 = vmatpush1.msra.mxu0 0.0
    %349 = vmatprep.subr.mxu0 0.0
    %350 = vmatpush1.msra.mxu0 0.0
    %351 = vmatprep.subr.mxu0 0.0
    %352 = vmatpush1.msra.mxu0 0.0
    %353 = vmatprep.subr.mxu0 0.0
    %354 = vmatpush1.msra.mxu0 0.0
    %355 = vmatprep.subr.mxu0 0.0
    %356 = vmatpush1.msra.mxu0 0.0
    %357 = vmatprep.subr.mxu0 0.0
    %358 = vmatpush1.msra.mxu0 0.0
    %359 = vmatprep.subr.mxu0 0.0
    %360 = vmatpush1.msra.mxu0 0.0
    %361 = vmatprep.mubr.f32.mxu0 %v153
    %362 = vmatmul.mubr.f32.gmra.mrb[0].mxu0 %v29
    %v363 = vpop.f32.mrb[0].mxu0
    %v364 = vadd.f32 0.0, %v363
    %v365 = vpop.f32.mrb[0].mxu0
    %v366 = vadd.f32 0.0, %v365
    %367 = vdwg.mxu0
    %v368 = vmul.f32 %v222, %v295
    %v369 = vmul.f32 %v224, %v364
    %v370 = vmul.f32 %v293, %v366
    %v371 = vld [vmem:[%s2] sm:$0xff]
    %v372 = vld [vmem:[%s2 + $0x8] sm:$0xff]
    %v373 = vld [vmem:[%s2 + $0x10] sm:$0xff]
    %v374 = vld [vmem:[%s2 + $0x18] sm:$0xff]
    %v375 = vld [vmem:[%s2 + $0x20] sm:$0xff]
    %v376 = vld [vmem:[%s2 + $0x28] sm:$0xff]
    %v377 = vld [vmem:[%s2 + $0x30] sm:$0xff]
    %v378 = vld [vmem:[%s2 + $0x38] sm:$0xff]
    %v379 = vld [vmem:[%s2 + $0x40] sm:$0xff]
    %v380 = vld [vmem:[%s2 + $0x48] sm:$0xff]
    %v381 = vld [vmem:[%s2 + $0x50] sm:$0xff]
    %v382 = vld [vmem:[%s2 + $0x58] sm:$0xff]
    %v383 = vld [vmem:[%s2 + $0x60] sm:$0xff]
    %v384 = vld [vmem:[%s2 + $0x68] sm:$0xff]
    %v385 = vld [vmem:[%s2 + $0x70] sm:$0xff]
    %v386 = vld [vmem:[%s2 + $0x78] sm:$0xff]
    %v387 = vld [vmem:[%s2 + $0x80] sm:$0xff]
    %v388 = vld [vmem:[%s2 + $0x88] sm:$0xff]
    %v389 = vld [vmem:[%s2 + $0x90] sm:$0xff]
    %v390 = vld [vmem:[%s2 + $0x98] sm:$0xff]
    %v391 = vld [vmem:[%s2 + $0xa0] sm:$0xff]
    %v392 = vld [vmem:[%s2 + $0xa8] sm:$0xff]
    %v393 = vld [vmem:[%s2 + $0xb0] sm:$0xff]
    %v394 = vld [vmem:[%s2 + $0xb8] sm:$0xff]
    %v395 = vld [vmem:[%s2 + $0xc0] sm:$0xff]
    %v396 = vld [vmem:[%s2 + $0xc8] sm:$0xff]
    %v397 = vld [vmem:[%s2 + $0xd0] sm:$0xff]
    %v398 = vld [vmem:[%s2 + $0xd8] sm:$0xff]
    %v399 = vld [vmem:[%s2 + $0xe0] sm:$0xff]
    %v400 = vld [vmem:[%s2 + $0xe8] sm:$0xff]
    %v401 = vld [vmem:[%s2 + $0xf0] sm:$0xff]
    %v402 = vld [vmem:[%s2 + $0xf8] sm:$0xff]
    %v403 = vld [vmem:[%s2 + $0x100] sm:$0xff]
    %v404 = vld [vmem:[%s2 + $0x108] sm:$0xff]
    %v405 = vld [vmem:[%s2 + $0x110] sm:$0xff]
    %v406 = vld [vmem:[%s2 + $0x118] sm:$0xff]
    %v407 = vld [vmem:[%s2 + $0x120] sm:$0xff]
    %v408 = vld [vmem:[%s2 + $0x128] sm:$0xff]
    %v409 = vld [vmem:[%s2 + $0x130] sm:$0xff]
    %v410 = vld [vmem:[%s2 + $0x138] sm:$0xff]
    %v411 = vld [vmem:[%s2 + $0x140] sm:$0xff]
    %v412 = vld [vmem:[%s2 + $0x148] sm:$0xff]
    %v413 = vld [vmem:[%s2 + $0x150] sm:$0xff]
    %v414 = vld [vmem:[%s2 + $0x158] sm:$0xff]
    %v415 = vld [vmem:[%s2 + $0x160] sm:$0xff]
    %v416 = vld [vmem:[%s2 + $0x168] sm:$0xff]
    %v417 = vld [vmem:[%s2 + $0x170] sm:$0xff]
    %v418 = vld [vmem:[%s2 + $0x178] sm:$0xff]
    %419 = vmatprep.subr.mxu0 0.0
    %420 = vmatpush1.msra.mxu0 %v371
    %421 = vmatprep.subr.mxu0 0.0
    %422 = vmatpush1.msra.mxu0 %v372
    %423 = vmatprep.subr.mxu0 0.0
    %424 = vmatpush1.msra.mxu0 %v373
    %425 = vmatprep.subr.mxu0 0.0
    %426 = vmatpush1.msra.mxu0 %v374
    %427 = vmatprep.subr.mxu0 0.0
    %428 = vmatpush1.msra.mxu0 %v375
    %429 = vmatprep.subr.mxu0 0.0
    %430 = vmatpush1.msra.mxu0 %v376
    %431 = vmatprep.subr.mxu0 0.0
    %432 = vmatpush1.msra.mxu0 %v377
    %433 = vmatprep.subr.mxu0 0.0
    %434 = vmatpush1.msra.mxu0 %v378
    %435 = vmatprep.subr.mxu0 0.0
    %436 = vmatpush1.msra.mxu0 %v379
    %437 = vmatprep.subr.mxu0 0.0
    %438 = vmatpush1.msra.mxu0 %v380
    %439 = vmatprep.subr.mxu0 0.0
    %440 = vmatpush1.msra.mxu0 %v381
    %441 = vmatprep.subr.mxu0 0.0
    %442 = vmatpush1.msra.mxu0 %v382
    %443 = vmatprep.subr.mxu0 0.0
    %444 = vmatpush1.msra.mxu0 %v383
    %445 = vmatprep.subr.mxu0 0.0
    %446 = vmatpush1.msra.mxu0 %v384
    %447 = vmatprep.subr.mxu0 0.0
    %448 = vmatpush1.msra.mxu0 %v385
    %449 = vmatprep.subr.mxu0 0.0
    %450 = vmatpush1.msra.mxu0 %v386
    %451 = vmatprep.subr.mxu0 0.0
    %452 = vmatpush1.msra.mxu0 %v387
    %453 = vmatprep.subr.mxu0 0.0
    %454 = vmatpush1.msra.mxu0 %v388
    %455 = vmatprep.subr.mxu0 0.0
    %456 = vmatpush1.msra.mxu0 %v389
    %457 = vmatprep.subr.mxu0 0.0
    %458 = vmatpush1.msra.mxu0 %v390
    %459 = vmatprep.subr.mxu0 0.0
    %460 = vmatpush1.msra.mxu0 %v391
    %461 = vmatprep.subr.mxu0 0.0
    %462 = vmatpush1.msra.mxu0 %v392
    %463 = vmatprep.subr.mxu0 0.0
    %464 = vmatpush1.msra.mxu0 %v393
    %465 = vmatprep.subr.mxu0 0.0
    %466 = vmatpush1.msra.mxu0 %v394
    %467 = vmatprep.subr.mxu0 0.0
    %468 = vmatpush1.msra.mxu0 %v395
    %469 = vmatprep.subr.mxu0 0.0
    %470 = vmatpush1.msra.mxu0 %v396
    %471 = vmatprep.subr.mxu0 0.0
    %472 = vmatpush1.msra.mxu0 %v397
    %473 = vmatprep.subr.mxu0 0.0
    %474 = vmatpush1.msra.mxu0 %v398
    %475 = vmatprep.subr.mxu0 0.0
    %476 = vmatpush1.msra.mxu0 %v399
    %477 = vmatprep.subr.mxu0 0.0
    %478 = vmatpush1.msra.mxu0 %v400
    %479 = vmatprep.subr.mxu0 0.0
    %480 = vmatpush1.msra.mxu0 %v401
    %481 = vmatprep.subr.mxu0 0.0
    %482 = vmatpush1.msra.mxu0 %v402
    %483 = vmatprep.mubr.f32.mxu0 %v369
    %484 = vmatmul.mubr.f32.gmra.mrb[0].mxu0 %v368
    %v485 = vpop.f32.mrb[0].mxu0
    %v486 = vadd.f32 0.0, %v485
    %v487 = vpop.f32.mrb[0].mxu0
    %488 = vdwg.mxu0
    %489 = vmatprep.subr.mxu0 0.0
    %490 = vmatpush1.msra.mxu0 %v403
    %491 = vmatprep.subr.mxu0 0.0
    %492 = vmatpush1.msra.mxu0 %v404
    %493 = vmatprep.subr.mxu0 0.0
    %494 = vmatpush1.msra.mxu0 %v405
    %495 = vmatprep.subr.mxu0 0.0
    %496 = vmatpush1.msra.mxu0 %v406
    %497 = vmatprep.subr.mxu0 0.0
    %498 = vmatpush1.msra.mxu0 %v407
    %499 = vmatprep.subr.mxu0 0.0
    %500 = vmatpush1.msra.mxu0 %v408
    %501 = vmatprep.subr.mxu0 0.0
    %502 = vmatpush1.msra.mxu0 %v409
    %503 = vmatprep.subr.mxu0 0.0
    %504 = vmatpush1.msra.mxu0 %v410
    %505 = vmatprep.subr.mxu0 0.0
    %506 = vmatpush1.msra.mxu0 %v411
    %507 = vmatprep.subr.mxu0 0.0
    %508 = vmatpush1.msra.mxu0 %v412
    %509 = vmatprep.subr.mxu0 0.0
    %510 = vmatpush1.msra.mxu0 %v413
    %511 = vmatprep.subr.mxu0 0.0
    %512 = vmatpush1.msra.mxu0 %v414
    %513 = vmatprep.subr.mxu0 0.0
    %514 = vmatpush1.msra.mxu0 %v415
    %515 = vmatprep.subr.mxu0 0.0
    %516 = vmatpush1.msra.mxu0 %v416
    %517 = vmatprep.subr.mxu0 0.0
    %518 = vmatpush1.msra.mxu0 %v417
    %519 = vmatprep.subr.mxu0 0.0
    %520 = vmatpush1.msra.mxu0 %v418
    %521 = vmatprep.subr.mxu0 0.0
    %522 = vmatpush1.msra.mxu0 0.0
    %523 = vmatprep.subr.mxu0 0.0
    %524 = vmatpush1.msra.mxu0 0.0
    %525 = vmatprep.subr.mxu0 0.0
    %526 = vmatpush1.msra.mxu0 0.0
    %527 = vmatprep.subr.mxu0 0.0
    %528 = vmatpush1.msra.mxu0 0.0
    %529 = vmatprep.subr.mxu0 0.0
    %530 = vmatpush1.msra.mxu0 0.0
    %531 = vmatprep.subr.mxu0 0.0
    %532 = vmatpush1.msra.mxu0 0.0
    %533 = vmatprep.subr.mxu0 0.0
    %534 = vmatpush1.msra.mxu0 0.0
    %535 = vmatprep.subr.mxu0 0.0
    %536 = vmatpush1.msra.mxu0 0.0
    %537 = vmatprep.subr.mxu0 0.0
    %538 = vmatpush1.msra.mxu0 0.0
    %539 = vmatprep.subr.mxu0 0.0
    %540 = vmatpush1.msra.mxu0 0.0
    %541 = vmatprep.subr.mxu0 0.0
    %542 = vmatpush1.msra.mxu0 0.0
    %543 = vmatprep.subr.mxu0 0.0
    %544 = vmatpush1.msra.mxu0 0.0
    %545 = vmatprep.subr.mxu0 0.0
    %546 = vmatpush1.msra.mxu0 0.0
    %547 = vmatprep.subr.mxu0 0.0
    %548 = vmatpush1.msra.mxu0 0.0
    %549 = vmatprep.subr.mxu0 0.0
    %550 = vmatpush1.msra.mxu0 0.0
    %551 = vmatprep.subr.mxu0 0.0
    %552 = vmatpush1.msra.mxu0 0.0
    %553 = vmatprep.mubr.f32.mxu0 0.0
    %554 = vmatmul.mubr.f32.gmra.mrb[0].mxu0 %v370
    %v555 = vpop.f32.mrb[0].mxu0
    %v556 = vadd.f32 %v486, %v555
    %v557 = vpop.f32.mrb[0].mxu0
    %558 = vdwg.mxu0
    %vm559 = vcmask 80896
    %560 = vst.msk [vmem:[#allocation5] sm:$0xff] %vm559, %v556
    // Predicated region
    $region18: #{tpu_custom_call.1} parent=1 // pred_check
      _
    $region19: #{tpu_custom_call.1} parent=1 // pred_check_branch
      %562 = sbr.rel (0) target = $region21
    $region20: #{tpu_custom_call.1} parent=1 // pred_region
      %s564 = ssub.s32 128, 128
      %565 = vsyncadd [#allocation4], %s564
      %s567 = sshll.u32 [#allocation5], 4
      %s568 = int_to_ptr.vmem [resolvable:$true] %s567
      %570 = dma.vmem_to_hbm [thread:$0]  %s568, 128, %s3, [#allocation4]
    $region21: #{tpu_custom_call.1} parent=1 // pred_fallthru
      _
    // Predicated region
    $region22: #{tpu_custom_call.1} parent=1 // pred_check
      _
    $region23: #{tpu_custom_call.1} parent=1 // pred_check_branch
      %572 = sbr.rel (0) target = $region25
    $region24: #{tpu_custom_call.1} parent=1 // pred_region
      %573 = dma.done [#allocation4], 128
    $region25: #{tpu_custom_call.1} parent=1 // pred_fallthru
      _
    %574 = vsyncpa [#allocation3], 1
    %575 = vsyncpa [#allocation4], 1

</llo_original>
